<compile_context>
chip_gen: v7x
topology: tpu7x:2x2x1
jax: 0.10.0
libtpu: 0.0.40
codegen_flags: <defaults>
</compile_context>

<pallas_src>
import functools

import jax
import jax.numpy as jnp
from jax import lax
from jax.experimental import pallas as pl
from jax.experimental.pallas import tpu as pltpu

# Fixed Sobel filters of the reference module (used by the pure-JAX reference).
SOBEL_X = ((-1.0, 0.0, 1.0), (-2.0, 0.0, 2.0), (-1.0, 0.0, 1.0))
SOBEL_Y = ((-1.0, -2.0, -1.0), (0.0, 0.0, 0.0), (1.0, 2.0, 1.0))


def _sobel_l1_kernel(pred_ref, targ_ref, out_ref, *, h, w, hw, hw_pad):
    """One grid step = one batch tile of flattened images.

    pred_ref / targ_ref : VMEM, block (b_tile, hw_pad), input dtype
                          (each row is one image flattened as y*W + x).
    out_ref             : VMEM, block (1, 8, 128) f32; this block's scalar
                          partial sum broadcast across the tile.
    """
    # Upcast after the DMA; linearity: conv(p) - conv(t) == conv(p - t).
    d = pred_ref[...].astype(jnp.float32) - targ_ref[...].astype(jnp.float32)

    # Lane-position iota j = y*W + x; all boundary masks derive from this one
    # (1, hw_pad) row and broadcast over the batch (sublane) axis.
    j = lax.broadcasted_iota(jnp.int32, (1, hw_pad), 1)
    x = j % w
    not_top = j >= w                    # y >= 1    -> d[y-1, x] exists
    not_bot = j < (h - 1) * w           # y <= H-2  -> d[y+1, x] exists
    not_lft = x != 0                    # x >= 1    -> v[y, x-1] exists
    not_rgt = x != (w - 1)              # x <= W-2  -> v[y, x+1] exists

    def shift(v, amt, valid):
        # Circular lane roll (XLU slot) + zero-mask of the wrapped /
        # out-of-image lanes == the conv2d(padding=1) zero halo, fused
        # in-vreg (no concat copies, no extra VMEM temporaries).
        return jnp.where(valid, pltpu.roll(v, amt % hw_pad, 1), 0.0)

    # --- vertical pass (shift by +/-W along the flattened lane axis) -------
    up = shift(d, w, not_top)                # d[y-1, x]
    dn = shift(d, hw_pad - w, not_bot)       # d[y+1, x]
    v1 = up + 2.0 * d + dn                   # (1,2,1) smooth  -> feeds Sobel-X
    v2 = dn - up                             # (-1,0,1) diff   -> feeds Sobel-Y

    # --- horizontal pass (shift by +/-1), fused straight into gx/gy --------
    gx = shift(v1, hw_pad - 1, not_rgt) - shift(v1, 1, not_lft)
    gy = shift(v2, 1, not_lft) + 2.0 * v2 + shift(v2, hw_pad - 1, not_rgt)

    contrib = jnp.abs(gx) + jnp.abs(gy)
    if hw_pad != hw:
        # Drop the lane-padding columns (only present when H*W % 128 != 0).
        contrib = jnp.where(j < hw, contrib, 0.0)

    # Batch-axis reduce first (VPU adds), then one cross-lane XLU reduce of a
    # single row; the scalar broadcast into a lane-dense (8,128) tile is
    # negligible per multi-MiB block.
    per_lane = jnp.sum(contrib, axis=0, keepdims=True)      # (1, hw_pad)
    s = jnp.sum(per_lane)
    out_ref[0] = jnp.broadcast_to(s, (8, 128)).astype(jnp.float32)


def simplified_gradient_loss(pred, target):
    """pred, target: (N, 1, H, W) NCHW (f32 or bf16). Returns scalar f32 loss."""
    N, C, H, W = pred.shape
    assert C == 1, "Sobel conv2d in the reference module is single-channel"
    assert target.shape == pred.shape

    hw = H * W
    hw_pad = ((hw + 127) // 128) * 128       # lane-dense last dim (>= 128)

    # Flatten each image onto the lane axis (free for contiguous NCHW, C==1).
    p = pred.reshape(N, hw)
    t = target.reshape(N, hw)

    # --- generation-aware VMEM budget & block size --------------------------
    try:
        vmem_cap = int(pltpu.get_tpu_info().vmem_capacity_bytes)
    except Exception:                         # defensive fallback
        vmem_cap = 64 * 1024 * 1024
    # ~50 MiB on v7x (64 MiB physical / TC), ~100 MiB on v5e/v6e (128 MiB).
    vmem_limit = min(int(vmem_cap * 0.8), 100 * 1024 * 1024)

    itemsize = jnp.dtype(pred.dtype).itemsize
    # 2 inputs x 2 pipeline buffers in the input dtype + ~8 live f32 temps.
    per_img_bytes = hw_pad * (4 * itemsize + 8 * 4)
    cap_imgs = max(8, (int(vmem_limit * 0.75) // per_img_bytes) // 8 * 8)

    # Enough blocks to respect the VMEM cap; >=2 blocks (v7x megacore) when
    # the batch is large enough to split into two >=8-row blocks.
    num_blocks = max(-(-N // cap_imgs), 2 if N > 8 else 1)
    num_blocks = min(num_blocks, max(1, -(-N // 8)))
    b_tile = ((-(-N // num_blocks) + 7) // 8) * 8            # sublane-aligned
    n_pad = num_blocks * b_tile

    # Zero-pad batch / lane axes (zero pred == zero target -> contributes 0),
    # decoupling block size from N's factorization and from H*W % 128.
    if n_pad != N or hw_pad != hw:
        p = jnp.pad(p, ((0, n_pad - N), (0, hw_pad - hw)))
        t = jnp.pad(t, ((0, n_pad - N), (0, hw_pad - hw)))

    kernel = functools.partial(_sobel_l1_kernel, h=H, w=W, hw=hw, hw_pad=hw_pad)

    partials = pl.pallas_call(
        kernel,
        out_shape=jax.ShapeDtypeStruct((num_blocks, 8, 128), jnp.float32),
        grid_spec=pltpu.PrefetchScalarGridSpec(
            num_scalar_prefetch=0,
            grid=(num_blocks,),
            in_specs=[
                pl.BlockSpec((b_tile, hw_pad), lambda i: (i, 0)),
                pl.BlockSpec((b_tile, hw_pad), lambda i: (i, 0)),
            ],
            out_specs=pl.BlockSpec((1, 8, 128), lambda i: (i, 0, 0)),
        ),
        compiler_params=pltpu.CompilerParams(
            dimension_semantics=("parallel",),   # independent blocks -> megacore OK
            vmem_limit_bytes=int(vmem_limit),
        ),
    )(p, t)

    # Each block's (8,128) tile holds its scalar partial sum broadcast.
    total = jnp.sum(partials[:, 0, 0])
    # Both F.l1_loss(mean) terms share the N*C*H*W denominator (C == 1).
    return total / jnp.float32(N * H * W)


def _ref_loss(pred, target):
    """Pure-JAX reference (lax conv) matching the PyTorch forward."""
    kx = jnp.array(SOBEL_X, jnp.float32).reshape(1, 1, 3, 3)
    ky = jnp.array(SOBEL_Y, jnp.float32).reshape(1, 1, 3, 3)

    def conv(x, w):
        return lax.conv_general_dilated(
            x.astype(jnp.float32), w, window_strides=(1, 1),
            padding=((1, 1), (1, 1)),
            dimension_numbers=("NCHW", "OIHW", "NCHW"))

    pgx, pgy = conv(pred, kx), conv(pred, ky)
    tgx, tgy = conv(target, kx), conv(target, ky)
    return jnp.mean(jnp.abs(pgx - tgx)) + jnp.mean(jnp.abs(pgy - tgy))


if __name__ == "__main__":
    key = jax.random.PRNGKey(0)
    k1, k2 = jax.random.split(key)
    pred = jax.random.normal(k1, (2, 1, 16, 16), dtype=jnp.float32)
    target = jax.random.normal(k2, (2, 1, 16, 16), dtype=jnp.float32)

    loss = jax.block_until_ready(simplified_gradient_loss(pred, target))
    ref = _ref_loss(pred, target)
    assert jnp.allclose(loss, ref, rtol=1e-5, atol=1e-5), (loss, ref)
    print("KERNEL_OK")
</pallas_src>

<mosaic_0001>
module attributes {stable_mosaic.version = 11 : i64} {
  func.func @_sobel_l1_kernel(%arg0: i32, %arg1: memref<8x256xf32, #tpu.memory_space<vmem>>, %arg2: memref<8x256xf32, #tpu.memory_space<vmem>>, %arg3: memref<1x8x128xf32, #tpu.memory_space<vmem>>) attributes {dimension_semantics = [#tpu.dimension_semantics<parallel>], iteration_bounds = array<i64: 1>, scalar_prefetch = 0 : i64, scratch_operands = 0 : i64, tpu.core_type = #tpu.core_type<tc>, window_params = [{transform_indices = @transform_0, window_bounds = array<i64: 8, 256>}, {transform_indices = @transform_1, window_bounds = array<i64: 8, 256>}, {transform_indices = @transform_2, window_bounds = array<i64: 1, 8, 128>}]} {
    %c0 = arith.constant 0 : index
    %c0_0 = arith.constant 0 : index
    %0 = vector.load %arg1[%c0, %c0_0] : memref<8x256xf32, #tpu.memory_space<vmem>>, vector<8x256xf32>
    %c0_1 = arith.constant 0 : index
    %c0_2 = arith.constant 0 : index
    %1 = vector.load %arg2[%c0_1, %c0_2] : memref<8x256xf32, #tpu.memory_space<vmem>>, vector<8x256xf32>
    %2 = arith.subf %0, %1 : vector<8x256xf32>
    %3 = tpu.iota {dimensions = array<i32: 1>} : vector<1x256xi32>
    %c16_i32 = arith.constant 16 : i32
    %c0_i32 = arith.constant 0 : i32
    %4 = arith.cmpi eq, %c16_i32, %c0_i32 : i32
    %c1_i32 = arith.constant 1 : i32
    %5 = arith.select %4, %c1_i32, %c16_i32 : i32
    %6 = vector.broadcast %5 : i32 to vector<1x256xi32>
    %7 = arith.remsi %3, %6 : vector<1x256xi32>
    %c0_i32_3 = arith.constant 0 : i32
    %8 = vector.broadcast %c0_i32_3 : i32 to vector<1x256xi32>
    %9 = arith.cmpi ne, %7, %8 : vector<1x256xi32>
    %c0_i32_4 = arith.constant 0 : i32
    %10 = vector.broadcast %c0_i32_4 : i32 to vector<1x256xi32>
    %11 = arith.cmpi slt, %7, %10 : vector<1x256xi32>
    %c0_i32_5 = arith.constant 0 : i32
    %12 = arith.cmpi slt, %5, %c0_i32_5 : i32
    %13 = vector.broadcast %12 : i1 to vector<1x256xi1>
    %14 = vector.broadcast %13 : vector<1x256xi1> to vector<1x256xi1>
    %15 = arith.xori %11, %14 : vector<1x256xi1>
    %16 = arith.andi %15, %9 : vector<1x256xi1>
    %17 = vector.broadcast %5 : i32 to vector<1x256xi32>
    %18 = arith.addi %7, %17 : vector<1x256xi32>
    %19 = arith.select %16, %18, %7 : vector<1x256xi1>, vector<1x256xi32>
    %c16_i32_6 = arith.constant 16 : i32
    %20 = vector.broadcast %c16_i32_6 : i32 to vector<1x256xi32>
    %21 = arith.cmpi sge, %3, %20 : vector<1x256xi32>
    %c240_i32 = arith.constant 240 : i32
    %22 = vector.broadcast %c240_i32 : i32 to vector<1x256xi32>
    %23 = arith.cmpi slt, %3, %22 : vector<1x256xi32>
    %c0_i32_7 = arith.constant 0 : i32
    %24 = vector.broadcast %c0_i32_7 : i32 to vector<1x256xi32>
    %25 = arith.cmpi ne, %19, %24 : vector<1x256xi32>
    %c15_i32 = arith.constant 15 : i32
    %26 = vector.broadcast %c15_i32 : i32 to vector<1x256xi32>
    %27 = arith.cmpi ne, %19, %26 : vector<1x256xi32>
    %c16_i32_8 = arith.constant 16 : i32
    %28 = tpu.dynamic_rotate %2 by %c16_i32_8 dim 1 : vector<8x256xf32>, i32 -> vector<8x256xf32>
    %cst = arith.constant 0.000000e+00 : f32
    %29 = vector.shape_cast %21 : vector<1x256xi1> to vector<1x256xi1>
    %30 = vector.broadcast %29 : vector<1x256xi1> to vector<8x256xi1>
    %31 = vector.broadcast %cst : f32 to vector<8x256xf32>
    %32 = arith.select %30, %28, %31 : vector<8x256xi1>, vector<8x256xf32>
    %c240_i32_9 = arith.constant 240 : i32
    %33 = tpu.dynamic_rotate %2 by %c240_i32_9 dim 1 : vector<8x256xf32>, i32 -> vector<8x256xf32>
    %cst_10 = arith.constant 0.000000e+00 : f32
    %34 = vector.shape_cast %23 : vector<1x256xi1> to vector<1x256xi1>
    %35 = vector.broadcast %34 : vector<1x256xi1> to vector<8x256xi1>
    %36 = vector.broadcast %cst_10 : f32 to vector<8x256xf32>
    %37 = arith.select %35, %33, %36 : vector<8x256xi1>, vector<8x256xf32>
    %cst_11 = arith.constant 2.000000e+00 : f32
    %38 = vector.broadcast %cst_11 : f32 to vector<8x256xf32>
    %39 = arith.mulf %38, %2 : vector<8x256xf32>
    %40 = arith.addf %32, %39 : vector<8x256xf32>
    %41 = arith.addf %40, %37 : vector<8x256xf32>
    %42 = arith.subf %37, %32 : vector<8x256xf32>
    %c255_i32 = arith.constant 255 : i32
    %43 = tpu.dynamic_rotate %41 by %c255_i32 dim 1 : vector<8x256xf32>, i32 -> vector<8x256xf32>
    %cst_12 = arith.constant 0.000000e+00 : f32
    %44 = vector.shape_cast %27 : vector<1x256xi1> to vector<1x256xi1>
    %45 = vector.broadcast %44 : vector<1x256xi1> to vector<8x256xi1>
    %46 = vector.broadcast %cst_12 : f32 to vector<8x256xf32>
    %47 = arith.select %45, %43, %46 : vector<8x256xi1>, vector<8x256xf32>
    %c1_i32_13 = arith.constant 1 : i32
    %48 = tpu.dynamic_rotate %41 by %c1_i32_13 dim 1 : vector<8x256xf32>, i32 -> vector<8x256xf32>
    %cst_14 = arith.constant 0.000000e+00 : f32
    %49 = vector.shape_cast %25 : vector<1x256xi1> to vector<1x256xi1>
    %50 = vector.broadcast %49 : vector<1x256xi1> to vector<8x256xi1>
    %51 = vector.broadcast %cst_14 : f32 to vector<8x256xf32>
    %52 = arith.select %50, %48, %51 : vector<8x256xi1>, vector<8x256xf32>
    %53 = arith.subf %47, %52 : vector<8x256xf32>
    %c1_i32_15 = arith.constant 1 : i32
    %54 = tpu.dynamic_rotate %42 by %c1_i32_15 dim 1 : vector<8x256xf32>, i32 -> vector<8x256xf32>
    %cst_16 = arith.constant 0.000000e+00 : f32
    %55 = vector.shape_cast %25 : vector<1x256xi1> to vector<1x256xi1>
    %56 = vector.broadcast %55 : vector<1x256xi1> to vector<8x256xi1>
    %57 = vector.broadcast %cst_16 : f32 to vector<8x256xf32>
    %58 = arith.select %56, %54, %57 : vector<8x256xi1>, vector<8x256xf32>
    %cst_17 = arith.constant 2.000000e+00 : f32
    %59 = vector.broadcast %cst_17 : f32 to vector<8x256xf32>
    %60 = arith.mulf %59, %42 : vector<8x256xf32>
    %61 = arith.addf %58, %60 : vector<8x256xf32>
    %c255_i32_18 = arith.constant 255 : i32
    %62 = tpu.dynamic_rotate %42 by %c255_i32_18 dim 1 : vector<8x256xf32>, i32 -> vector<8x256xf32>
    %cst_19 = arith.constant 0.000000e+00 : f32
    %63 = vector.shape_cast %27 : vector<1x256xi1> to vector<1x256xi1>
    %64 = vector.broadcast %63 : vector<1x256xi1> to vector<8x256xi1>
    %65 = vector.broadcast %cst_19 : f32 to vector<8x256xf32>
    %66 = arith.select %64, %62, %65 : vector<8x256xi1>, vector<8x256xf32>
    %67 = arith.addf %61, %66 : vector<8x256xf32>
    %68 = math.absf %53 : vector<8x256xf32>
    %69 = math.absf %67 : vector<8x256xf32>
    %70 = arith.addf %68, %69 : vector<8x256xf32>
    %cst_20 = arith.constant dense<0.000000e+00> : vector<256xf32>
    %71 = vector.multi_reduction <add>, %70, %cst_20 [0] : vector<8x256xf32> to vector<256xf32>
    %72 = vector.shape_cast %71 : vector<256xf32> to vector<1x256xf32>
    %73 = vector.shape_cast %72 : vector<1x256xf32> to vector<1x1x256xf32>
    %cst_21 = arith.constant dense<0.000000e+00> : vector<1xf32>
    %74 = vector.multi_reduction <add>, %73, %cst_21 [1, 2] : vector<1x1x256xf32> to vector<1xf32>
    %75 = vector.shape_cast %74 : vector<1xf32> to vector<1x1x1xf32>
    %76 = vector.extract %75[0, 0, 0] : f32 from vector<1x1x1xf32>
    %77 = vector.broadcast %76 : f32 to vector<8x128xf32>
    %c0_22 = arith.constant 0 : index
    %c0_23 = arith.constant 0 : index
    %c0_24 = arith.constant 0 : index
    %78 = vector.load %arg3[%c0_22, %c0_23, %c0_24] : memref<1x8x128xf32, #tpu.memory_space<vmem>>, vector<1x8x128xf32>
    %79 = vector.shape_cast %78 : vector<1x8x128xf32> to vector<8x128xf32>
    %80 = vector.shape_cast %77 : vector<8x128xf32> to vector<1x8x128xf32>
    tpu.vector_store %arg3[%c0_22, %c0_23, %c0_24], %80 {strides = array<i32>} : memref<1x8x128xf32, #tpu.memory_space<vmem>>, vector<1x8x128xf32>,
    return
  }
  func.func @transform_0(%arg0: i32) -> (i32, i32) {
    %c0_i32 = arith.constant 0 : i32
    %c0_i32_0 = arith.constant 0 : i32
    return %arg0, %c0_i32 : i32, i32
  }
  func.func @transform_1(%arg0: i32) -> (i32, i32) {
    %c0_i32 = arith.constant 0 : i32
    %c0_i32_0 = arith.constant 0 : i32
    return %arg0, %c0_i32 : i32, i32
  }
  func.func @transform_2(%arg0: i32) -> (i32, i32, i32) {
    %c0_i32 = arith.constant 0 : i32
    %c0_i32_0 = arith.constant 0 : i32
    %c0_i32_1 = arith.constant 0 : i32
    return %arg0, %c0_i32, %c0_i32_0 : i32, i32, i32
  }
}

</mosaic_0001>

<llo_original>
// kernel: tpu_custom_call.1
$region0: #{tpu_custom_call.1}
  #allocation0 [shape = 'u32[]', space=smem, size = 0x4, offset = 0x4, fixed_abs, tag = 'smem constant byte address 0x4 - core index']
  #allocation1 [shape = 'u32[144,128]{1,0:T(1,128)}', space=vmem, size = 0x12000, scoped, tag = 'internal scratch']
  %s0 = inlined_call_operand.hbm [shape: f32[8,256], index: 0, kind: input, shape index: {}]
  %s1 = inlined_call_operand.hbm [shape: f32[8,256], index: 1, kind: input, shape index: {}]
  %s2 = inlined_call_operand.hbm [shape: f32[1,8,128], index: 2, kind: output, shape index: {}]
  %s3 = sld [smem:[#allocation0]]
  $region26: #{tpu_custom_call.1} parent=0
    _
  %s5 = ssub.s32 1, %s3
  %s6 = scalar_select 0, %s5, %s3
  $region1: #{tpu_custom_call.1} parent=0
    #allocation2 [shape = 'u8[8192]{0}', space=vmem, size = 0x2000, scoped, tag = 'input window, operand 0, single buffered']
    #allocation3 [shape = 's32[1]{0}', space=sflag, size = 0x4, scoped, tag = 'scoped memory for tpu_custom_call.1']
    #allocation4 [shape = 's32[1]{0}', space=sflag, size = 0x4, scoped, tag = 'scoped memory for tpu_custom_call.1']
    #allocation5 [shape = 'u8[8192]{0}', space=vmem, size = 0x2000, scoped, tag = 'input window, operand 1, single buffered']
    #allocation6 [shape = 's32[1]{0}', space=sflag, size = 0x4, scoped, tag = 'scoped memory for tpu_custom_call.1']
    #allocation7 [shape = 'u8[4096]{0}', space=vmem, size = 0x1000, scoped, tag = 'output window, operand 0, single buffered']
    %7 = vsyncpa [#allocation3], 0
    %8 = vsyncpa [#allocation6], 0
    %9 = vsyncpa [#allocation4], 0
    // Predicated region
    $region2: #{tpu_custom_call.1} parent=1 // pred_check
      _
    $region3: #{tpu_custom_call.1} parent=1 // pred_check_branch
      %11 = sbr.rel (0) target = $region5
    $region4: #{tpu_custom_call.1} parent=1 // pred_region
      %s13 = ssub.s32 256, 256
      %14 = vsyncadd [#allocation3], %s13
      %s16 = sshll.u32 [#allocation2], 4
      %s17 = int_to_ptr.vmem [resolvable:$true] %s16
      %19 = dma.hbm_to_vmem [thread:$0]  %s0, 256, %s17, [#allocation3]
    $region5: #{tpu_custom_call.1} parent=1 // pred_fallthru
      _
    // Predicated region
    $region6: #{tpu_custom_call.1} parent=1 // pred_check
      _
    $region7: #{tpu_custom_call.1} parent=1 // pred_check_branch
      %21 = sbr.rel (0) target = $region9
    $region8: #{tpu_custom_call.1} parent=1 // pred_region
      %s23 = ssub.s32 256, 256
      %24 = vsyncadd [#allocation6], %s23
      %s26 = sshll.u32 [#allocation5], 4
      %s27 = int_to_ptr.vmem [resolvable:$true] %s26
      %29 = dma.hbm_to_vmem [thread:$0]  %s1, 256, %s27, [#allocation6]
    $region9: #{tpu_custom_call.1} parent=1 // pred_fallthru
      _
    // Predicated region
    $region10: #{tpu_custom_call.1} parent=1 // pred_check
      _
    $region11: #{tpu_custom_call.1} parent=1 // pred_check_branch
      %31 = sbr.rel (0) target = $region13
    $region12: #{tpu_custom_call.1} parent=1 // pred_region
      %32 = dma.done [#allocation3], 256
    $region13: #{tpu_custom_call.1} parent=1 // pred_fallthru
      _
    // Predicated region
    $region14: #{tpu_custom_call.1} parent=1 // pred_check
      _
    $region15: #{tpu_custom_call.1} parent=1 // pred_check_branch
      %34 = sbr.rel (0) target = $region17
    $region16: #{tpu_custom_call.1} parent=1 // pred_region
      %35 = dma.done [#allocation6], 256
    $region17: #{tpu_custom_call.1} parent=1 // pred_fallthru
      _
    %v36 = vld [vmem:[#allocation2] sm:$0xff]
    %v37 = vld [vmem:[#allocation2 + $0x8] sm:$0xff]
    %v38 = vld [vmem:[#allocation5] sm:$0xff]
    %v39 = vld [vmem:[#allocation5 + $0x8] sm:$0xff]
    %v40 = vsub.f32 %v36, %v38
    %v41 = vsub.f32 %v37, %v39
    %v42 = vlaneseq
    %v43 = vand.u32 %v42, 127
    %v44 = vadd.s32 %v43, 128
    %vm45 = vcmp.lt.s32.totalorder %v43, 0
    %v46 = vsub.s32 0, %v43
    %v47 = vsel %vm45, %v46, %v43
    %v48 = vshrl.u32 %v47, 4
    %v49 = vand.u32 %v47, 15
    %v50 = vsub.s32 0, %v49
    %v51 = vsel %vm45, %v50, %v49
    %vm52 = vcmp.lt.s32.totalorder %v44, 0
    %v53 = vsub.s32 0, %v44
    %v54 = vsel %vm52, %v53, %v44
    %v55 = vshrl.u32 %v54, 4
    %v56 = vand.u32 %v54, 15
    %v57 = vsub.s32 0, %v56
    %v58 = vsel %vm52, %v57, %v56
    %vm59 = vcmp.ne.s32.totalorder %v51, 0
    %vm60 = vcmp.ne.s32.totalorder %v58, 0
    %vm61 = vcmp.lt.s32.totalorder %v51, 0
    %vm62 = vcmp.lt.s32.totalorder %v58, 0
    %vm63 = vmand %vm61, %vm59
    %vm64 = vmand %vm62, %vm60
    %v65 = vadd.s32 %v51, 16
    %v66 = vadd.s32 %v58, 16
    %v67 = vsel %vm63, %v65, %v51
    %v68 = vsel %vm64, %v66, %v58
    %vm69 = vcmp.ge.s32.totalorder %v43, 16
    %vm70 = vcmp.ge.s32.totalorder %v44, 16
    %vm71 = vcmp.lt.s32.totalorder %v43, 240
    %vm72 = vcmp.lt.s32.totalorder %v44, 240
    %vm73 = vcmp.ne.s32.totalorder %v67, 0
    %vm74 = vcmp.ne.s32.totalorder %v68, 0
    %vm75 = vcmp.ne.s32.totalorder %v67, 15
    %vm76 = vcmp.ne.s32.totalorder %v68, 15
    %77 = vrot.lane.b32.xlu0 %v40, 16
    %v78 = vpop.permute.xlu0 %77
    %79 = vrot.lane.b32.xlu0 %v41, 16
    %v80 = vpop.permute.xlu0 %79
    %vm81 = vcmp.lt.s32.totalorder %v43, 16
    %v82 = vsel %vm81, %v78, %v80
    %v83 = vsel %vm81, %v80, %v78
    %v84 = vsel %vm69, 1, 0
    %v85 = vsel %vm70, 1, 0
    %vm86 = vcmp.eq.s32.totalorder %v84, 1
    %vm87 = vcmp.eq.s32.totalorder %v85, 1
    %v88 = vsel %vm86, %v83, 0.0
    %v89 = vsel %vm87, %v82, 0.0
    %90 = vrot.lane.b32.xlu0 %v40, 112
    %v91 = vpop.permute.xlu0 %90
    %92 = vrot.lane.b32.xlu0 %v41, 112
    %v93 = vpop.permute.xlu0 %92
    %vm94 = vcmp.lt.s32.totalorder %v43, 112
    %v95 = vsel %vm94, %v91, %v93
    %v96 = vsel %vm94, %v93, %v91
    %v97 = vsel %vm71, 1, 0
    %v98 = vsel %vm72, 1, 0
    %vm99 = vcmp.eq.s32.totalorder %v97, 1
    %vm100 = vcmp.eq.s32.totalorder %v98, 1
    %v101 = vsel %vm99, %v95, 0.0
    %v102 = vsel %vm100, %v96, 0.0
    %v103 = vmul.f32 %v40, 2.0
    %v104 = vmul.f32 %v41, 2.0
    %v105 = vadd.f32 %v88, %v103
    %v106 = vadd.f32 %v89, %v104
    %v107 = vadd.f32 %v105, %v101
    %v108 = vadd.f32 %v106, %v102
    %v109 = vsub.f32 %v101, %v88
    %v110 = vsub.f32 %v102, %v89
    %111 = vrot.lane.b32.xlu0 %v107, 127
    %v112 = vpop.permute.xlu0 %111
    %113 = vrot.lane.b32.xlu0 %v108, 127
    %v114 = vpop.permute.xlu0 %113
    %vm115 = vcmp.lt.s32.totalorder %v43, 127
    %v116 = vsel %vm115, %v112, %v114
    %v117 = vsel %vm115, %v114, %v112
    %v118 = vsel %vm75, 1, 0
    %v119 = vsel %vm76, 1, 0
    %vm120 = vcmp.eq.s32.totalorder %v118, 1
    %vm121 = vcmp.eq.s32.totalorder %v119, 1
    %v122 = vsel %vm120, %v116, 0.0
    %v123 = vsel %vm121, %v117, 0.0
    %124 = vrot.lane.b32.xlu0 %v107, 1
    %v125 = vpop.permute.xlu0 %124
    %126 = vrot.lane.b32.xlu0 %v108, 1
    %v127 = vpop.permute.xlu0 %126
    %vm128 = vcmp.lt.s32.totalorder %v43, 1
    %v129 = vsel %vm128, %v125, %v127
    %v130 = vsel %vm128, %v127, %v125
    %v131 = vsel %vm73, 1, 0
    %v132 = vsel %vm74, 1, 0
    %vm133 = vcmp.eq.s32.totalorder %v131, 1
    %vm134 = vcmp.eq.s32.totalorder %v132, 1
    %v135 = vsel %vm133, %v130, 0.0
    %v136 = vsel %vm134, %v129, 0.0
    %v137 = vsub.f32 %v122, %v135
    %v138 = vsub.f32 %v123, %v136
    %139 = vrot.lane.b32.xlu0 %v109, 1
    %v140 = vpop.permute.xlu0 %139
    %141 = vrot.lane.b32.xlu0 %v110, 1
    %v142 = vpop.permute.xlu0 %141
    %v143 = vsel %vm128, %v140, %v142
    %v144 = vsel %vm128, %v142, %v140
    %v145 = vsel %vm133, %v144, 0.0
    %v146 = vsel %vm134, %v143, 0.0
    %v147 = vmul.f32 %v109, 2.0
    %v148 = vmul.f32 %v110, 2.0
    %v149 = vadd.f32 %v145, %v147
    %v150 = vadd.f32 %v146, %v148
    %151 = vrot.lane.b32.xlu0 %v109, 127
    %v152 = vpop.permute.xlu0 %151
    %153 = vrot.lane.b32.xlu0 %v110, 127
    %v154 = vpop.permute.xlu0 %153
    %v155 = vsel %vm115, %v152, %v154
    %v156 = vsel %vm115, %v154, %v152
    %v157 = vsel %vm120, %v155, 0.0
    %v158 = vsel %vm121, %v156, 0.0
    %v159 = vadd.f32 %v149, %v157
    %v160 = vadd.f32 %v150, %v158
    %v161 = vand.u32 2147483647, %v137
    %v162 = vand.u32 2147483647, %v138
    %v163 = vand.u32 2147483647, %v159
    %v164 = vand.u32 2147483647, %v160
    %v165 = vadd.f32 %v161, %v163
    %v166 = vadd.f32 %v162, %v164
    %v167 = vrot.slane %v165, 4
    %v168 = vadd.f32 %v165, %v167
    %v169 = vrot.slane %v168, 2
    %v170 = vadd.f32 %v168, %v169
    %v171 = vrot.slane %v170, 1
    %v172 = vadd.f32 %v170, %v171
    %v173 = vrot.slane %v166, 4
    %v174 = vadd.f32 %v166, %v173
    %v175 = vrot.slane %v174, 2
    %v176 = vadd.f32 %v174, %v175
    %v177 = vrot.slane %v176, 1
    %v178 = vadd.f32 %v176, %v177
    %vm179 = vcmask 1040384
    %v180 = vsel %vm179, %v172, 0.0
    %v181 = vsel %vm179, %v178, 0.0
    %v182 = vadd.f32 %v180, %v181
    %183 = vadd.xlane.f32.xlu0 %v182
    %v184 = vpop.xlane.xlu0 %183
    %v185 = vrot.slane %v184, 4
    %v186 = vadd.f32 %v184, %v185
    %v187 = vrot.slane %v186, 2
    %v188 = vadd.f32 %v186, %v187
    %v189 = vrot.slane %v188, 1
    %v190 = vadd.f32 %v188, %v189
    %s191 = vtos %v190
    %v192 = vstv %s191
    %193 = vst [vmem:[#allocation7] sm:$0xff] %v192
    // Predicated region
    $region18: #{tpu_custom_call.1} parent=1 // pred_check
      _
    $region19: #{tpu_custom_call.1} parent=1 // pred_check_branch
      %195 = sbr.rel (0) target = $region21
    $region20: #{tpu_custom_call.1} parent=1 // pred_region
      %s197 = ssub.s32 128, 128
      %198 = vsyncadd [#allocation4], %s197
      %s200 = sshll.u32 [#allocation7], 4
      %s201 = int_to_ptr.vmem [resolvable:$true] %s200
      %203 = dma.vmem_to_hbm [thread:$0]  %s201, 128, %s2, [#allocation4]
    $region21: #{tpu_custom_call.1} parent=1 // pred_fallthru
      _
    // Predicated region
    $region22: #{tpu_custom_call.1} parent=1 // pred_check
      _
    $region23: #{tpu_custom_call.1} parent=1 // pred_check_branch
      %205 = sbr.rel (0) target = $region25
    $region24: #{tpu_custom_call.1} parent=1 // pred_region
      %206 = dma.done [#allocation4], 128
    $region25: #{tpu_custom_call.1} parent=1 // pred_fallthru
      _
    %207 = vsyncpa [#allocation3], 1
    %208 = vsyncpa [#allocation6], 1
    %209 = vsyncpa [#allocation4], 1

</llo_original>
